<compile_context>
chip_gen: v7x
topology: tpu7x:2x2x1
jax: 0.10.0
libtpu: 0.0.40
codegen_flags: <defaults>
</compile_context>

<pallas_src>
import functools

import jax
import jax.numpy as jnp
from jax import lax
from jax.experimental import pallas as pl
from jax.experimental.pallas import tpu as pltpu


def _round_up(v, m):
    return ((v + m - 1) // m) * m


def _ce_kernel(x_ref, t_ref, out_ref, *, num_classes, hw, sp, needs_mask):
    # x_ref / t_ref block: (1, C, SP, 128); out_ref block: (1, 1, 8, 128).

    # --- max over the class axis (unrolled loop over C class planes) ---
    m = x_ref[0, 0].astype(jnp.float32)                        # (SP, 128)
    for c in range(1, num_classes):
        m = jnp.maximum(m, x_ref[0, c].astype(jnp.float32))

    # --- sum-exp + (argmax(target) -> picked logit), first-occurrence ties ---
    x0 = x_ref[0, 0].astype(jnp.float32)
    s = jnp.exp(x0 - m)
    best_t = t_ref[0, 0].astype(jnp.float32)
    picked = x0
    for c in range(1, num_classes):
        xc = x_ref[0, c].astype(jnp.float32)
        tc = t_ref[0, c].astype(jnp.float32)
        s = s + jnp.exp(xc - m)
        upd = tc > best_t                    # strict '>' keeps the first index
        best_t = jnp.where(upd, tc, best_t)
        picked = jnp.where(upd, xc, picked)

    # per-pixel CE = logsumexp(x) - x[label]
    ce = (m + jnp.log(s)) - picked                             # (SP, 128)

    if needs_mask:
        # zero out contributions from padded pixels (global pixel idx >= H*W)
        j = pl.program_id(1)
        row = lax.broadcasted_iota(jnp.int32, (sp, 128), 0)
        lane = lax.broadcasted_iota(jnp.int32, (sp, 128), 1)
        gpix = j * (sp * 128) + row * 128 + lane
        ce = jnp.where(gpix < hw, ce, 0.0)

    # per-(sublane, lane) partial sums -> lane-dense (8, 128) output block
    out_ref[0, 0] = ce.reshape(sp // 8, 8, 128).sum(axis=0)


def g_loss_pallas(inp, tgt, *, max_strips_per_block=256):
    """inp, tgt: NCHW float arrays.  Returns scalar mean cross-entropy of
    inp against argmax(tgt, channel), matching the PyTorch G_loss forward."""
    n, c_in, h, w = inp.shape
    nt, c_tgt, ht, wt = tgt.shape
    assert (n, h, w) == (nt, ht, wt), "input/target spatial shapes must match"
    assert c_in == c_tgt, "class (channel) dims of input and target must match"
    c = c_in
    hw = h * w

    # NCHW -> (N, C, H*W): contiguous reshape, no transpose, no extra HBM pass.
    x = inp.reshape(n, c, hw)
    t = tgt.reshape(n, c, hw)

    # Pixel tiling: 128 pixels per lane-strip, SP strips per block
    # (SP * 128 pixels per grid step, multiple of 8 sublanes).
    s_needed = _round_up(hw, 128) // 128
    sp = min(max_strips_per_block, _round_up(s_needed, 8))
    j_chunks = _round_up(s_needed, sp) // sp
    s_pad = j_chunks * sp
    hw_pad = s_pad * 128
    needs_mask = hw_pad != hw
    if needs_mask:
        pad = hw_pad - hw
        x = jnp.pad(x, ((0, 0), (0, 0), (0, pad)))
        t = jnp.pad(t, ((0, 0), (0, 0), (0, pad)))
    x = x.reshape(n, c, s_pad, 128)
    t = t.reshape(n, c, s_pad, 128)

    kernel = functools.partial(
        _ce_kernel, num_classes=c, hw=hw, sp=sp, needs_mask=needs_mask
    )

    partials = pl.pallas_call(
        kernel,
        out_shape=jax.ShapeDtypeStruct((n, j_chunks, 8, 128), jnp.float32),
        grid_spec=pltpu.PrefetchScalarGridSpec(
            num_scalar_prefetch=0,
            grid=(n, j_chunks),
            in_specs=[
                pl.BlockSpec((1, c, sp, 128), lambda i, j: (i, 0, j, 0)),
                pl.BlockSpec((1, c, sp, 128), lambda i, j: (i, 0, j, 0)),
            ],
            out_specs=pl.BlockSpec((1, 1, 8, 128), lambda i, j: (i, j, 0, 0)),
        ),
        compiler_params=pltpu.CompilerParams(
            # every grid point writes its own output block -> fully parallel
            dimension_semantics=("parallel", "parallel"),
            # above the v5e/v6e scoped defaults, below v7x's 64 MiB physical
            vmem_limit_bytes=48 * 1024 * 1024,
        ),
    )(x, t)

    # tiny final reduction + mean in plain JAX
    return jnp.sum(partials, dtype=jnp.float32) / jnp.float32(n * hw)


def _reference(inp, tgt):
    n, c, h, w = tgt.shape
    x = jnp.transpose(inp, (0, 2, 3, 1)).reshape(n * h * w, -1)
    t = jnp.transpose(tgt, (0, 2, 3, 1)).reshape(n * h * w, -1)
    labels = jnp.argmax(t, axis=1)
    logp = jax.nn.log_softmax(x, axis=-1)
    return -jnp.mean(jnp.take_along_axis(logp, labels[:, None], axis=1))


if __name__ == "__main__":
    key = jax.random.PRNGKey(0)
    k1, k2 = jax.random.split(key)
    N, C, H, W = 2, 4, 16, 16
    inp = jax.random.normal(k1, (N, C, H, W), dtype=jnp.float32)
    tgt = jax.random.normal(k2, (N, C, H, W), dtype=jnp.float32)

    loss = g_loss_pallas(inp, tgt)
    jax.block_until_ready(loss)

    ref = _reference(inp, tgt)
    assert jnp.allclose(loss, ref, rtol=1e-5, atol=1e-5), (loss, ref)

    print("KERNEL_OK")
</pallas_src>

<mosaic_0001>
module attributes {stable_mosaic.version = 11 : i64} {
  func.func @_ce_kernel(%arg0: i32, %arg1: i32, %arg2: memref<1x4x8x128xf32, #tpu.memory_space<vmem>>, %arg3: memref<1x4x8x128xf32, #tpu.memory_space<vmem>>, %arg4: memref<1x1x8x128xf32, #tpu.memory_space<vmem>>) attributes {dimension_semantics = [#tpu.dimension_semantics<parallel>, #tpu.dimension_semantics<parallel>], iteration_bounds = array<i64: 2, 1>, scalar_prefetch = 0 : i64, scratch_operands = 0 : i64, tpu.core_type = #tpu.core_type<tc>, window_params = [{transform_indices = @transform_0, window_bounds = array<i64: 1, 4, 8, 128>}, {transform_indices = @transform_1, window_bounds = array<i64: 1, 4, 8, 128>}, {transform_indices = @transform_2, window_bounds = array<i64: 1, 1, 8, 128>}]} {
    %c0 = arith.constant 0 : index
    %c0_0 = arith.constant 0 : index
    %c0_1 = arith.constant 0 : index
    %c0_2 = arith.constant 0 : index
    %0 = vector.load %arg2[%c0, %c0_0, %c0_1, %c0_2] : memref<1x4x8x128xf32, #tpu.memory_space<vmem>>, vector<1x1x8x128xf32>
    %1 = vector.shape_cast %0 : vector<1x1x8x128xf32> to vector<8x128xf32>
    %c0_3 = arith.constant 0 : index
    %c1 = arith.constant 1 : index
    %c0_4 = arith.constant 0 : index
    %c0_5 = arith.constant 0 : index
    %2 = vector.load %arg2[%c0_3, %c1, %c0_4, %c0_5] : memref<1x4x8x128xf32, #tpu.memory_space<vmem>>, vector<1x1x8x128xf32>
    %3 = vector.shape_cast %2 : vector<1x1x8x128xf32> to vector<8x128xf32>
    %4 = arith.maximumf %1, %3 : vector<8x128xf32>
    %c0_6 = arith.constant 0 : index
    %c2 = arith.constant 2 : index
    %c0_7 = arith.constant 0 : index
    %c0_8 = arith.constant 0 : index
    %5 = vector.load %arg2[%c0_6, %c2, %c0_7, %c0_8] : memref<1x4x8x128xf32, #tpu.memory_space<vmem>>, vector<1x1x8x128xf32>
    %6 = vector.shape_cast %5 : vector<1x1x8x128xf32> to vector<8x128xf32>
    %7 = arith.maximumf %4, %6 : vector<8x128xf32>
    %c0_9 = arith.constant 0 : index
    %c3 = arith.constant 3 : index
    %c0_10 = arith.constant 0 : index
    %c0_11 = arith.constant 0 : index
    %8 = vector.load %arg2[%c0_9, %c3, %c0_10, %c0_11] : memref<1x4x8x128xf32, #tpu.memory_space<vmem>>, vector<1x1x8x128xf32>
    %9 = vector.shape_cast %8 : vector<1x1x8x128xf32> to vector<8x128xf32>
    %10 = arith.maximumf %7, %9 : vector<8x128xf32>
    %c0_12 = arith.constant 0 : index
    %c0_13 = arith.constant 0 : index
    %c0_14 = arith.constant 0 : index
    %c0_15 = arith.constant 0 : index
    %11 = vector.load %arg2[%c0_12, %c0_13, %c0_14, %c0_15] : memref<1x4x8x128xf32, #tpu.memory_space<vmem>>, vector<1x1x8x128xf32>
    %12 = vector.shape_cast %11 : vector<1x1x8x128xf32> to vector<8x128xf32>
    %13 = arith.subf %12, %10 : vector<8x128xf32>
    %14 = math.exp %13 : vector<8x128xf32>
    %c0_16 = arith.constant 0 : index
    %c0_17 = arith.constant 0 : index
    %c0_18 = arith.constant 0 : index
    %c0_19 = arith.constant 0 : index
    %15 = vector.load %arg3[%c0_16, %c0_17, %c0_18, %c0_19] : memref<1x4x8x128xf32, #tpu.memory_space<vmem>>, vector<1x1x8x128xf32>
    %16 = vector.shape_cast %15 : vector<1x1x8x128xf32> to vector<8x128xf32>
    %c0_20 = arith.constant 0 : index
    %c1_21 = arith.constant 1 : index
    %c0_22 = arith.constant 0 : index
    %c0_23 = arith.constant 0 : index
    %17 = vector.load %arg2[%c0_20, %c1_21, %c0_22, %c0_23] : memref<1x4x8x128xf32, #tpu.memory_space<vmem>>, vector<1x1x8x128xf32>
    %18 = vector.shape_cast %17 : vector<1x1x8x128xf32> to vector<8x128xf32>
    %c0_24 = arith.constant 0 : index
    %c1_25 = arith.constant 1 : index
    %c0_26 = arith.constant 0 : index
    %c0_27 = arith.constant 0 : index
    %19 = vector.load %arg3[%c0_24, %c1_25, %c0_26, %c0_27] : memref<1x4x8x128xf32, #tpu.memory_space<vmem>>, vector<1x1x8x128xf32>
    %20 = vector.shape_cast %19 : vector<1x1x8x128xf32> to vector<8x128xf32>
    %21 = arith.subf %18, %10 : vector<8x128xf32>
    %22 = math.exp %21 : vector<8x128xf32>
    %23 = arith.addf %14, %22 : vector<8x128xf32>
    %24 = arith.cmpf ogt, %20, %16 : vector<8x128xf32>
    %25 = arith.select %24, %20, %16 : vector<8x128xi1>, vector<8x128xf32>
    %26 = arith.select %24, %18, %12 : vector<8x128xi1>, vector<8x128xf32>
    %c0_28 = arith.constant 0 : index
    %c2_29 = arith.constant 2 : index
    %c0_30 = arith.constant 0 : index
    %c0_31 = arith.constant 0 : index
    %27 = vector.load %arg2[%c0_28, %c2_29, %c0_30, %c0_31] : memref<1x4x8x128xf32, #tpu.memory_space<vmem>>, vector<1x1x8x128xf32>
    %28 = vector.shape_cast %27 : vector<1x1x8x128xf32> to vector<8x128xf32>
    %c0_32 = arith.constant 0 : index
    %c2_33 = arith.constant 2 : index
    %c0_34 = arith.constant 0 : index
    %c0_35 = arith.constant 0 : index
    %29 = vector.load %arg3[%c0_32, %c2_33, %c0_34, %c0_35] : memref<1x4x8x128xf32, #tpu.memory_space<vmem>>, vector<1x1x8x128xf32>
    %30 = vector.shape_cast %29 : vector<1x1x8x128xf32> to vector<8x128xf32>
    %31 = arith.subf %28, %10 : vector<8x128xf32>
    %32 = math.exp %31 : vector<8x128xf32>
    %33 = arith.addf %23, %32 : vector<8x128xf32>
    %34 = arith.cmpf ogt, %30, %25 : vector<8x128xf32>
    %35 = arith.select %34, %30, %25 : vector<8x128xi1>, vector<8x128xf32>
    %36 = arith.select %34, %28, %26 : vector<8x128xi1>, vector<8x128xf32>
    %c0_36 = arith.constant 0 : index
    %c3_37 = arith.constant 3 : index
    %c0_38 = arith.constant 0 : index
    %c0_39 = arith.constant 0 : index
    %37 = vector.load %arg2[%c0_36, %c3_37, %c0_38, %c0_39] : memref<1x4x8x128xf32, #tpu.memory_space<vmem>>, vector<1x1x8x128xf32>
    %38 = vector.shape_cast %37 : vector<1x1x8x128xf32> to vector<8x128xf32>
    %c0_40 = arith.constant 0 : index
    %c3_41 = arith.constant 3 : index
    %c0_42 = arith.constant 0 : index
    %c0_43 = arith.constant 0 : index
    %39 = vector.load %arg3[%c0_40, %c3_41, %c0_42, %c0_43] : memref<1x4x8x128xf32, #tpu.memory_space<vmem>>, vector<1x1x8x128xf32>
    %40 = vector.shape_cast %39 : vector<1x1x8x128xf32> to vector<8x128xf32>
    %41 = arith.subf %38, %10 : vector<8x128xf32>
    %42 = math.exp %41 : vector<8x128xf32>
    %43 = arith.addf %33, %42 : vector<8x128xf32>
    %44 = arith.cmpf ogt, %40, %35 : vector<8x128xf32>
    %45 = arith.select %44, %38, %36 : vector<8x128xi1>, vector<8x128xf32>
    %46 = math.log %43 : vector<8x128xf32>
    %47 = arith.addf %10, %46 : vector<8x128xf32>
    %48 = arith.subf %47, %45 : vector<8x128xf32>
    %49 = tpu.iota {dimensions = array<i32: 0>} : vector<8x128xi32>
    %50 = tpu.iota {dimensions = array<i32: 1>} : vector<8x128xi32>
    %c1024_i32 = arith.constant 1024 : i32
    %51 = arith.muli %arg1, %c1024_i32 : i32
    %c128_i32 = arith.constant 128 : i32
    %52 = vector.broadcast %c128_i32 : i32 to vector<8x128xi32>
    %53 = arith.muli %49, %52 : vector<8x128xi32>
    %54 = vector.broadcast %51 : i32 to vector<8x128xi32>
    %55 = arith.addi %54, %53 : vector<8x128xi32>
    %56 = arith.addi %55, %50 : vector<8x128xi32>
    %c256_i32 = arith.constant 256 : i32
    %57 = vector.broadcast %c256_i32 : i32 to vector<8x128xi32>
    %58 = arith.cmpi slt, %56, %57 : vector<8x128xi32>
    %cst = arith.constant 0.000000e+00 : f32
    %59 = vector.broadcast %cst : f32 to vector<8x128xf32>
    %60 = arith.select %58, %48, %59 : vector<8x128xi1>, vector<8x128xf32>
    %61 = vector.shape_cast %60 : vector<8x128xf32> to vector<1x8x128xf32>
    %cst_44 = arith.constant dense<0.000000e+00> : vector<8x128xf32>
    %62 = vector.multi_reduction <add>, %61, %cst_44 [0] : vector<1x8x128xf32> to vector<8x128xf32>
    %c0_45 = arith.constant 0 : index
    %c0_46 = arith.constant 0 : index
    %c0_47 = arith.constant 0 : index
    %c0_48 = arith.constant 0 : index
    %63 = vector.load %arg4[%c0_45, %c0_46, %c0_47, %c0_48] : memref<1x1x8x128xf32, #tpu.memory_space<vmem>>, vector<1x1x8x128xf32>
    %64 = vector.shape_cast %63 : vector<1x1x8x128xf32> to vector<8x128xf32>
    %65 = vector.shape_cast %62 : vector<8x128xf32> to vector<1x1x8x128xf32>
    tpu.vector_store %arg4[%c0_45, %c0_46, %c0_47, %c0_48], %65 {strides = array<i32>} : memref<1x1x8x128xf32, #tpu.memory_space<vmem>>, vector<1x1x8x128xf32>,
    return
  }
  func.func @transform_0(%arg0: i32, %arg1: i32) -> (i32, i32, i32, i32) {
    %c0_i32 = arith.constant 0 : i32
    %c0_i32_0 = arith.constant 0 : i32
    %c0_i32_1 = arith.constant 0 : i32
    return %arg0, %c0_i32, %arg1, %c0_i32_0 : i32, i32, i32, i32
  }
  func.func @transform_1(%arg0: i32, %arg1: i32) -> (i32, i32, i32, i32) {
    %c0_i32 = arith.constant 0 : i32
    %c0_i32_0 = arith.constant 0 : i32
    %c0_i32_1 = arith.constant 0 : i32
    return %arg0, %c0_i32, %arg1, %c0_i32_0 : i32, i32, i32, i32
  }
  func.func @transform_2(%arg0: i32, %arg1: i32) -> (i32, i32, i32, i32) {
    %c0_i32 = arith.constant 0 : i32
    %c0_i32_0 = arith.constant 0 : i32
    %c0_i32_1 = arith.constant 0 : i32
    return %arg0, %arg1, %c0_i32, %c0_i32_0 : i32, i32, i32, i32
  }
}

</mosaic_0001>

<llo_original>
// kernel: tpu_custom_call.1
$region0: #{tpu_custom_call.1}
  #allocation0 [shape = 'u32[]', space=smem, size = 0x4, offset = 0x4, fixed_abs, tag = 'smem constant byte address 0x4 - core index']
  #allocation1 [shape = 'u32[144,128]{1,0:T(1,128)}', space=vmem, size = 0x12000, scoped, tag = 'internal scratch']
  %s0 = inlined_call_operand.hbm [shape: f32[2,4,8,128], index: 0, kind: input, shape index: {}]
  %s1 = inlined_call_operand.hbm [shape: f32[2,4,8,128], index: 1, kind: input, shape index: {}]
  %s2 = inlined_call_operand.hbm [shape: f32[2,1,8,128], index: 2, kind: output, shape index: {}]
  %s3 = sld [smem:[#allocation0]]
  $region49: #{tpu_custom_call.1} parent=0
    _
  %s5 = ssub.s32 1, %s3
  %s6 = scalar_select 0, %s5, %s3
  $region1: #{tpu_custom_call.1} parent=0
    #allocation2 [shape = 'u8[32768]{0}', space=vmem, size = 0x8000, scoped, tag = 'input window, operand 0']
    #allocation3 [shape = 's32[2]{0}', space=sflag, size = 0x8, scoped, tag = 'scoped memory for tpu_custom_call.1']
    #allocation4 [shape = 's32[2]{0}', space=sflag, size = 0x8, scoped, tag = 'scoped memory for tpu_custom_call.1']
    #allocation5 [shape = 'u8[32768]{0}', space=vmem, size = 0x8000, scoped, tag = 'input window, operand 1']
    #allocation6 [shape = 's32[2]{0}', space=sflag, size = 0x8, scoped, tag = 'scoped memory for tpu_custom_call.1']
    #allocation7 [shape = 'u8[8192]{0}', space=vmem, size = 0x2000, scoped, tag = 'output window, operand 0']
    %7 = vsyncpa [#allocation3], 0
    %s8 = scalar_lea.sflag [#allocation3], 1
    %9 = vsyncpa %s8, 0
    %10 = vsyncpa [#allocation6], 0
    %s11 = scalar_lea.sflag [#allocation6], 1
    %12 = vsyncpa %s11, 0
    %13 = vsyncpa [#allocation4], 0
    %s14 = scalar_lea.sflag [#allocation4], 1
    %15 = vsyncpa %s14, 0
    loop: start=0, step=1, limit=4
    $region2: #{tpu_custom_call.1} parent=1 // loop_pre_header
      _
    $region3: #{tpu_custom_call.1} parent=1 // loop_header
      %s17 = sphi 0, %s21
      %p18 = scmp.ge.s32.totalorder %s17, 4
      %s24 = sphi 0, %s36
      %s25 = sphi 0, %s32
      %s26 = sphi 0, %s24
      %s27 = sphi 0, %s25
      %s28 = sphi 0, %s26
      %s29 = sphi 0, %s27
      %s41 = sphi 0, %s43
      %s44 = sphi 0, %s41
      %s45 = sphi 0, %s44
      %s61 = sphi 0, %s45
      %s69 = sphi 0, %s71
      %s72 = sphi 0, %s69
      %s73 = sphi 0, %s72
      %s89 = sphi 0, %s73
      %s97 = sphi 0, %s99
      %s100 = sphi 0, %s97
      %s101 = sphi 0, %s100
      %s117 = sphi 0, %s101
    $region4: #{tpu_custom_call.1} parent=1 // loop_header_branch
      %20 = sbr.rel (%p18) target = $region8
    $region5: #{tpu_custom_call.1} parent=1 // loop_body
      %s22 = ssub.s32 %s17, 1
      %s23 = ssub.s32 %s17, 2
      %s30 = sadd.s32 1, %s25
      %p31 = scmp.ge.s32.totalorder %s30, 1
      %s32 = scalar_select %p31, 0, %s30
      %s33 = sadd.s32 1, %s24
      %s34 = scalar_select %p31, %s33, %s24
      %p35 = scmp.ge.s32.totalorder %s34, 2
      %s36 = scalar_select %p35, 0, %s34
      %s37 = ssub.s32 %s24, %s36
      %s38 = ssub.s32 %s25, %s32
      %s39 = sor.u32 %s37, %s38
      %p40 = scmp.eq.s32.totalorder %s39, 0
      %s42 = sadd.s32 %s41, 1
      %s43 = scalar_select %p40, %s41, %s42
      %p46 = pneg %p40
      %p47 = scmp.eq.s32.totalorder %s17, 1
      %p48 = por %p46, %p47
      %p49 = scmp.ne.s32.totalorder %s41, %s44
      %p50 = scmp.eq.s32.totalorder %s17, 0
      %p51 = por %p49, %p50
      %p52 = scmp.ne.s32.totalorder %s41, %s44
      %p53 = scmp.eq.s32.totalorder %s22, 1
      %p54 = por %p52, %p53
      %p55 = scmp.ne.s32.totalorder %s44, %s45
      %p56 = scmp.eq.s32.totalorder %s22, 0
      %p57 = por %p55, %p56
      %p58 = scmp.ne.s32.totalorder %s44, %s45
      %p59 = scmp.eq.s32.totalorder %s23, 1
      %p60 = por %p58, %p59
      %p62 = scmp.ne.s32.totalorder %s45, %s61
      %p63 = scmp.eq.s32.totalorder %s23, 0
      %p64 = por %p62, %p63
      %s65 = ssub.s32 %s24, %s36
      %s66 = ssub.s32 %s25, %s32
      %s67 = sor.u32 %s65, %s66
      %p68 = scmp.eq.s32.totalorder %s67, 0
      %s70 = sadd.s32 %s69, 1
      %s71 = scalar_select %p68, %s69, %s70
      %p74 = pneg %p68
      %p75 = scmp.eq.s32.totalorder %s17, 1
      %p76 = por %p74, %p75
      %p77 = scmp.ne.s32.totalorder %s69, %s72
      %p78 = scmp.eq.s32.totalorder %s17, 0
      %p79 = por %p77, %p78
      %p80 = scmp.ne.s32.totalorder %s69, %s72
      %p81 = scmp.eq.s32.totalorder %s22, 1
      %p82 = por %p80, %p81
      %p83 = scmp.ne.s32.totalorder %s72, %s73
      %p84 = scmp.eq.s32.totalorder %s22, 0
      %p85 = por %p83, %p84
      %p86 = scmp.ne.s32.totalorder %s72, %s73
      %p87 = scmp.eq.s32.totalorder %s23, 1
      %p88 = por %p86, %p87
      %p90 = scmp.ne.s32.totalorder %s73, %s89
      %p91 = scmp.eq.s32.totalorder %s23, 0
      %p92 = por %p90, %p91
      %s93 = ssub.s32 %s24, %s36
      %s94 = ssub.s32 %s25, %s32
      %s95 = sor.u32 %s93, %s94
      %p96 = scmp.eq.s32.totalorder %s95, 0
      %s98 = sadd.s32 %s97, 1
      %s99 = scalar_select %p96, %s97, %s98
      %p102 = pneg %p96
      %p103 = scmp.eq.s32.totalorder %s17, 1
      %p104 = por %p102, %p103
      %p105 = scmp.ne.s32.totalorder %s97, %s100
      %p106 = scmp.eq.s32.totalorder %s17, 0
      %p107 = por %p105, %p106
      %p108 = scmp.ne.s32.totalorder %s97, %s100
      %p109 = scmp.eq.s32.totalorder %s22, 1
      %p110 = por %p108, %p109
      %p111 = scmp.ne.s32.totalorder %s100, %s101
      %p112 = scmp.eq.s32.totalorder %s22, 0
      %p113 = por %p111, %p112
      %p114 = scmp.ne.s32.totalorder %s100, %s101
      %p115 = scmp.eq.s32.totalorder %s23, 1
      %p116 = por %p114, %p115
      %p118 = scmp.ne.s32.totalorder %s101, %s117
      %p119 = scmp.eq.s32.totalorder %s23, 0
      %p120 = por %p118, %p119
      %p121 = scmp.le.s32.totalorder 1, %s17
      %p122 = scmp.lt.s32.totalorder %s17, 3
      %p123 = pnand %p121, %p122
      %p124 = pneg %p123
      // Predicated region
      $region9: #{tpu_custom_call.1} parent=5 // pred_check
        _
      $region10: #{tpu_custom_call.1} parent=5 // pred_check_branch
        %126 = sbr.rel (%p123) target = $region12
      $region11: #{tpu_custom_call.1} parent=5 // pred_region
        %s127 = ssub.s32 %s17, 1
      $region12: #{tpu_custom_call.1} parent=5 // pred_fallthru
        _
      %p128 = scmp.lt.s32.totalorder %s17, 2
      // Predicated region
      $region13: #{tpu_custom_call.1} parent=5 // pred_check
        %p129 = pneg %p128
      $region14: #{tpu_custom_call.1} parent=5 // pred_check_branch
        %131 = sbr.rel (%p129) target = $region16
      $region15: #{tpu_custom_call.1} parent=5 // pred_region
        // Predicated region
        $region17: #{tpu_custom_call.1} parent=15 // pred_check
          %p132 = pneg %p51
        $region18: #{tpu_custom_call.1} parent=15 // pred_check_branch
          %134 = sbr.rel (%p132) target = $region20
        $region19: #{tpu_custom_call.1} parent=15 // pred_region
          %s135 = sand.u32 %s41, 1
          %s136 = scalar_lea.sflag [#allocation3], %s135
          %s137 = sand.u32 %s41, 1
          %s138 = smul.addr %s137, 32
          %s139 = scalar_lea.vmem [#allocation2], %s138
          %s141 = ssub.s32 512, 512
          %142 = vsyncadd %s136, %s141
          %s143 = smul.addr %s24, 4
          %s144 = sadd.s32 %s25, %s143
          %s145 = smul.addr %s144, 128
          %s146 = scalar_lea.hbm %s0, %s145
          %s147 = sshll.u32 %s139, 4
          %s148 = int_to_ptr.vmem [resolvable:$true] %s147
          %153 = dma.hbm_to_vmem [thread:$0]  %s146, 512, %s148, %s136, 128, 128, 8
        $region20: #{tpu_custom_call.1} parent=15 // pred_fallthru
          _
        // Predicated region
        $region21: #{tpu_custom_call.1} parent=15 // pred_check
          %p154 = pneg %p79
        $region22: #{tpu_custom_call.1} parent=15 // pred_check_branch
          %156 = sbr.rel (%p154) target = $region24
        $region23: #{tpu_custom_call.1} parent=15 // pred_region
          %s157 = sand.u32 %s69, 1
          %s158 = scalar_lea.sflag [#allocation6], %s157
          %s159 = sand.u32 %s69, 1
          %s160 = smul.addr %s159, 32
          %s161 = scalar_lea.vmem [#allocation5], %s160
          %s163 = ssub.s32 512, 512
          %164 = vsyncadd %s158, %s163
          %s165 = smul.addr %s24, 4
          %s166 = sadd.s32 %s25, %s165
          %s167 = smul.addr %s166, 128
          %s168 = scalar_lea.hbm %s1, %s167
          %s169 = sshll.u32 %s161, 4
          %s170 = int_to_ptr.vmem [resolvable:$true] %s169
          %175 = dma.hbm_to_vmem [thread:$0]  %s168, 512, %s170, %s158, 128, 128, 8
        $region24: #{tpu_custom_call.1} parent=15 // pred_fallthru
          _
      $region16: #{tpu_custom_call.1} parent=5 // pred_fallthru
        _
      %p176 = scmp.le.s32.totalorder 1, %s17
      %p177 = scmp.lt.s32.totalorder %s17, 3
      %p178 = pnand %p176, %p177
      %p179 = pneg %p178
      // Predicated region
      $region25: #{tpu_custom_call.1} parent=5 // pred_check
        _
      $region26: #{tpu_custom_call.1} parent=5 // pred_check_branch
        %181 = sbr.rel (%p178) target = $region28
      $region27: #{tpu_custom_call.1} parent=5 // pred_region
        %s182 = ssub.s32 %s17, 1
        %s183 = sand.u32 %s44, 1
        %s184 = scalar_lea.sflag [#allocation3], %s183
        %s185 = sand.u32 %s44, 1
        %s186 = smul.addr %s185, 32
        %s187 = scalar_lea.vmem [#allocation2], %s186
        // Predicated region
        $region29: #{tpu_custom_call.1} parent=27 // pred_check
          %p188 = pneg %p57
        $region30: #{tpu_custom_call.1} parent=27 // pred_check_branch
          %190 = sbr.rel (%p188) target = $region32
        $region31: #{tpu_custom_call.1} parent=27 // pred_region
          %191 = dma.done %s184, 512
        $region32: #{tpu_custom_call.1} parent=27 // pred_fallthru
          _
        %s192 = sand.u32 %s72, 1
        %s193 = scalar_lea.sflag [#allocation6], %s192
        %s194 = sand.u32 %s72, 1
        %s195 = smul.addr %s194, 32
        %s196 = scalar_lea.vmem [#allocation5], %s195
        // Predicated region
        $region33: #{tpu_custom_call.1} parent=27 // pred_check
          %p197 = pneg %p85
        $region34: #{tpu_custom_call.1} parent=27 // pred_check_branch
          %199 = sbr.rel (%p197) target = $region36
        $region35: #{tpu_custom_call.1} parent=27 // pred_region
          %200 = dma.done %s193, 512
        $region36: #{tpu_custom_call.1} parent=27 // pred_fallthru
          _
        %s201 = sand.u32 %s44, 1
        %s202 = scalar_lea.sflag [#allocation3], %s201
        %s203 = sand.u32 %s44, 1
        %s204 = smul.addr %s203, 32
        %s205 = scalar_lea.vmem [#allocation2], %s204
        %p206 = pneg %p57
        %p207 = pneg %p54
        %s208 = sand.u32 %s72, 1
        %s209 = scalar_lea.sflag [#allocation6], %s208
        %s210 = sand.u32 %s72, 1
        %s211 = smul.addr %s210, 32
        %s212 = scalar_lea.vmem [#allocation5], %s211
        %p213 = pneg %p85
        %p214 = pneg %p82
        %p215 = pneg %p113
        %p216 = pneg %p110
        %s217 = sand.u32 %s100, 1
        %s218 = scalar_lea.sflag [#allocation4], %s217
        %s219 = sand.u32 %s100, 1
        %s220 = smul.addr %s219, 8
        %s221 = scalar_lea.vmem [#allocation7], %s220
        %v222 = vld [vmem:[%s187] sm:$0xff]
        %s223 = scalar_lea.vmem %s187, 8 [#allocation2]
        %v224 = vld [vmem:[%s223] sm:$0xff]
        %v225 = vmax.f32 %v222, %v224
        %s226 = scalar_lea.vmem %s187, 16 [#allocation2]
        %v227 = vld [vmem:[%s226] sm:$0xff]
        %v228 = vmax.f32 %v225, %v227
        %s229 = scalar_lea.vmem %s187, 24 [#allocation2]
        %v230 = vld [vmem:[%s229] sm:$0xff]
        %v231 = vmax.f32 %v228, %v230
        %v232 = vsub.f32 %v222, %v231
        %v233 = vmul.f32 %v232, 1.442695
        %v234 = vpow.pop %v233
        %v235 = vld [vmem:[%s196] sm:$0xff]
        %s236 = scalar_lea.vmem %s196, 8 [#allocation5]
        %v237 = vld [vmem:[%s236] sm:$0xff]
        %v238 = vsub.f32 %v224, %v231
        %v239 = vmul.f32 %v238, 1.442695
        %v240 = vpow.pop %v239
        %v241 = vadd.f32 %v234, %v240
        %vm242 = vcmp.gt.f32.partialorder %v237, %v235
        %v243 = vsel %vm242, %v237, %v235
        %v244 = vsel %vm242, %v224, %v222
        %s245 = scalar_lea.vmem %s196, 16 [#allocation5]
        %v246 = vld [vmem:[%s245] sm:$0xff]
        %v247 = vsub.f32 %v227, %v231
        %v248 = vmul.f32 %v247, 1.442695
        %v249 = vpow.pop %v248
        %v250 = vadd.f32 %v241, %v249
        %vm251 = vcmp.gt.f32.partialorder %v246, %v243
        %v252 = vsel %vm251, %v246, %v243
        %v253 = vsel %vm251, %v227, %v244
        %s254 = scalar_lea.vmem %s196, 24 [#allocation5]
        %v255 = vld [vmem:[%s254] sm:$0xff]
        %v256 = vsub.f32 %v230, %v231
        %v257 = vmul.f32 %v256, 1.442695
        %v258 = vpow.pop %v257
        %v259 = vadd.f32 %v250, %v258
        %vm260 = vcmp.gt.f32.partialorder %v255, %v252
        %v261 = vsel %vm260, %v230, %v253
        %v262 = vlog2.pop %v259
        %v263 = vmul.f32 %v262, 0.6931472
        %v264 = vadd.f32 %v231, %v263
        %v265 = vsub.f32 %v264, %v261
        %v266 = vlaneseq
        %v267 = vshrl.u32 %v266, 7
        %v268 = vlaneseq
        %v269 = vand.u32 %v268, 127
        %s270 = smul.u32 %s27, 1024
        %v271 = vmul.u32 %v267, 128
        %v272 = vstv %s270
        %v273 = vadd.s32 %v272, %v271
        %v274 = vadd.s32 %v273, %v269
        %vm275 = vcmp.lt.s32.totalorder %v274, 256
        %v276 = vsel %vm275, %v265, 0.0
        %v277 = vadd.f32 %v276, 0.0
        %278 = vst [vmem:[%s221] sm:$0xff] %v277
        %s279 = sand.u32 %s100, 1
        %s280 = scalar_lea.sflag [#allocation4], %s279
        %s281 = sand.u32 %s100, 1
        %s282 = smul.addr %s281, 8
        %s283 = scalar_lea.vmem [#allocation7], %s282
        // Predicated region
        $region37: #{tpu_custom_call.1} parent=27 // pred_check
          %p284 = pneg %p110
        $region38: #{tpu_custom_call.1} parent=27 // pred_check_branch
          %286 = sbr.rel (%p284) target = $region40
        $region39: #{tpu_custom_call.1} parent=27 // pred_region
          %s288 = ssub.s32 128, 128
          %289 = vsyncadd %s280, %s288
          %s290 = sadd.s32 %s27, %s26
          %s291 = smul.addr %s290, 128
          %s292 = scalar_lea.hbm %s2, %s291
          %s294 = sshll.u32 %s283, 4
          %s295 = int_to_ptr.vmem [resolvable:$true] %s294
          %297 = dma.vmem_to_hbm [thread:$0]  %s295, 128, %s292, %s280
        $region40: #{tpu_custom_call.1} parent=27 // pred_fallthru
          _
      $region28: #{tpu_custom_call.1} parent=5 // pred_fallthru
        _
      %p298 = scmp.le.s32.totalorder 2, %s17
      // Predicated region
      $region41: #{tpu_custom_call.1} parent=5 // pred_check
        %p299 = pneg %p298
      $region42: #{tpu_custom_call.1} parent=5 // pred_check_branch
        %301 = sbr.rel (%p299) target = $region44
      $region43: #{tpu_custom_call.1} parent=5 // pred_region
        %s302 = ssub.s32 %s17, 2
        // Predicated region
        $region45: #{tpu_custom_call.1} parent=43 // pred_check
          %p303 = pneg %p116
        $region46: #{tpu_custom_call.1} parent=43 // pred_check_branch
          %305 = sbr.rel (%p303) target = $region48
        $region47: #{tpu_custom_call.1} parent=43 // pred_region
          %s306 = sand.u32 %s101, 1
          %s307 = scalar_lea.sflag [#allocation4], %s306
          %s308 = sand.u32 %s101, 1
          %s309 = smul.addr %s308, 8
          %s310 = scalar_lea.vmem [#allocation7], %s309
          %311 = dma.done %s307, 128
        $region48: #{tpu_custom_call.1} parent=43 // pred_fallthru
          _
      $region44: #{tpu_custom_call.1} parent=5 // pred_fallthru
        _
    $region6: #{tpu_custom_call.1} parent=1 // loop_footer
      %s21 = sadd.s32 1, %s17
    $region7: #{tpu_custom_call.1} parent=1 // loop_footer_branch
      %16 = sbr.rel target = $region3
    $region8: #{tpu_custom_call.1} parent=1 // loop_exit
      _
    %312 = vsyncpa [#allocation3], 1
    %s313 = scalar_lea.sflag [#allocation3], 1
    %314 = vsyncpa %s313, 1
    %315 = vsyncpa [#allocation6], 1
    %s316 = scalar_lea.sflag [#allocation6], 1
    %317 = vsyncpa %s316, 1
    %318 = vsyncpa [#allocation4], 1
    %s319 = scalar_lea.sflag [#allocation4], 1
    %320 = vsyncpa %s319, 1

</llo_original>
